<compile_context>
chip_gen: v7x
topology: tpu7x:2x2x1
jax: 0.10.0
libtpu: 0.0.40
codegen_flags: <defaults>
</compile_context>

<pallas_src>
import functools

import jax
import jax.numpy as jnp
from jax.experimental import pallas as pl
from jax.experimental.pallas import tpu as pltpu


def _round_up(x, m):
    return (x + m - 1) // m * m


def _tpu_defaults():
    """Per-generation tile maxima and VMEM limit (bytes)."""
    try:
        kind = jax.devices()[0].device_kind.lower()
    except Exception:  # pragma: no cover
        kind = ""
    if "v7" in kind:
        # 64 MiB physical VMEM per TC: leave headroom for compiler internal scratch.
        return dict(tm_max=768, tn_max=1024, th_max=256, vmem_limit=56 * 1024 * 1024)
    if "v6" in kind:
        # HBM-bound at tm=512; tm=1024 restores arithmetic intensity, 128 MiB VMEM.
        return dict(tm_max=1024, tn_max=2048, th_max=512, vmem_limit=100 * 1024 * 1024)
    if "v5" in kind:
        # v5e roofline already MXU-bound at tm=512.
        return dict(tm_max=512, tn_max=2048, th_max=512, vmem_limit=100 * 1024 * 1024)
    return dict(tm_max=512, tn_max=1024, th_max=512, vmem_limit=64 * 1024 * 1024)


def _vmem_bytes(tm, tn, th, d_in_p, out_itemsize):
    """Rough double-buffered footprint estimate for the tile choice."""
    x_b = 2 * tm * d_in_p * 2          # x tile, bf16, 2 buffers
    w1_b = 2 * d_in_p * th * 2         # w1 tile, bf16
    w2_b = 2 * th * tn * 2             # w2 tile, bf16
    b_b = 2 * (th + tn) * 4            # biases (f32)
    o_b = 2 * tm * tn * out_itemsize   # output tile
    acc = tm * tn * 4                  # f32 accumulator scratch
    h = tm * th * 4                    # materialized f32 hidden intermediate
    return x_b + w1_b + w2_b + b_b + o_b + acc + h


def ffn_kernel(x_ref, w1_ref, b1_ref, w2_ref, b2_ref, o_ref, acc_ref):
    """One (tm, tn) output tile; grid axis 2 reduces over hidden-dim tiles."""
    k = pl.program_id(2)

    @pl.when(k == 0)
    def _():
        acc_ref[...] = jnp.zeros_like(acc_ref)

    # fc1 partial: (tm, D_in) @ (D_in, th) on the MXU, f32 accumulation.
    h = jnp.dot(x_ref[...], w1_ref[...], preferred_element_type=jnp.float32)
    # bias + ReLU in f32; elementwise in H, so tiling the hidden dim is exact.
    h = jnp.maximum(h + b1_ref[...], 0.0)

    # fc2 partial: (tm, th) @ (th, tn) accumulated into the resident f32 scratch.
    acc_ref[...] += jnp.dot(h.astype(w2_ref.dtype), w2_ref[...],
                            preferred_element_type=jnp.float32)

    @pl.when(k == pl.num_programs(2) - 1)
    def _():
        o_ref[...] = (acc_ref[...] + b2_ref[...]).astype(o_ref.dtype)


def feedforward_pallas(x2d, w1_t, b1, w2_t, b2, *, tm, tn, th, out_dtype, vmem_limit):
    """x2d: (M, D_in) bf16; w1_t: (D_in, H) bf16; b1: (1, H) f32;
       w2_t: (H, D_out) bf16; b2: (1, D_out) f32.
       Pre-padded: M % tm == 0, H % th == 0, D_out % tn == 0, dims multiples of 128."""
    M, D_in = x2d.shape
    H, D_out = w2_t.shape
    assert M % tm == 0 and H % th == 0 and D_out % tn == 0

    n_i, n_j = M // tm, D_out // tn
    grid = (n_i, n_j, H // th)

    flops = 2 * M * (D_in * H + H * D_out)
    out_bytes = M * D_out * jnp.dtype(out_dtype).itemsize
    # x read once per row tile; w1 replayed per (i, j); w2 replayed per i.
    bytes_accessed = (x2d.size * 2
                      + n_i * n_j * (w1_t.size * 2 + b1.size * 4)
                      + n_i * (w2_t.size * 2 + b2.size * 4)
                      + out_bytes)

    return pl.pallas_call(
        ffn_kernel,
        out_shape=jax.ShapeDtypeStruct((M, D_out), out_dtype),
        grid_spec=pltpu.PrefetchScalarGridSpec(
            num_scalar_prefetch=0,
            grid=grid,
            in_specs=[
                pl.BlockSpec((tm, D_in), lambda i, j, k: (i, 0)),   # x row tile (fetched once per i)
                pl.BlockSpec((D_in, th), lambda i, j, k: (0, k)),   # w1^T hidden tile
                pl.BlockSpec((1, th), lambda i, j, k: (0, k)),      # b1 hidden tile
                pl.BlockSpec((th, tn), lambda i, j, k: (k, j)),     # w2^T (hidden, out) tile
                pl.BlockSpec((1, tn), lambda i, j, k: (0, j)),      # b2 out tile
            ],
            out_specs=pl.BlockSpec((tm, tn), lambda i, j, k: (i, j)),
            scratch_shapes=[pltpu.VMEM((tm, tn), jnp.float32)],
        ),
        compiler_params=pltpu.CompilerParams(
            dimension_semantics=("parallel", "parallel", "arbitrary"),
            vmem_limit_bytes=vmem_limit,
        ),
        cost_estimate=pl.CostEstimate(flops=flops, transcendentals=0,
                                      bytes_accessed=bytes_accessed),
    )(x2d, w1_t, b1, w2_t, b2)


@functools.partial(
    jax.jit,
    static_argnames=("tm", "tn", "th", "m_p", "d_in_p", "out_dim", "out_dtype", "vmem_limit"))
def _ffn_forward(x2d, w1_p, b1_p, w2_p, b2_p, *, tm, tn, th, m_p, d_in_p,
                 out_dim, out_dtype, vmem_limit):
    # Pad/cast under jit so the fill + scatter + slice fuse with surrounding ops.
    M, D_in = x2d.shape
    xb = jnp.zeros((m_p, d_in_p), jnp.bfloat16).at[:M, :D_in].set(x2d.astype(jnp.bfloat16))
    y = feedforward_pallas(xb, w1_p, b1_p, w2_p, b2_p,
                           tm=tm, tn=tn, th=th, out_dtype=out_dtype, vmem_limit=vmem_limit)
    # Padded rows/columns are garbage/zero and sliced off here.
    return y[:M, :out_dim]


class FeedForwardPallas:
    """Pallas equivalent of torch FeedForward(input_dim, hidden_dim, output_dim)."""

    def __init__(self, input_dim, hidden_dim, output_dim, key,
                 *, tm_max=None, tn_max=None, th_max=None, vmem_limit=None):
        self.input_dim, self.hidden_dim, self.output_dim = input_dim, hidden_dim, output_dim

        k1, k2, k3, k4 = jax.random.split(key, 4)
        # Deterministic init mimicking nn.Linear's uniform(-1/sqrt(fan_in), 1/sqrt(fan_in)).
        lim1 = 1.0 / (input_dim ** 0.5)
        lim2 = 1.0 / (hidden_dim ** 0.5)
        # torch stores weight as (out, in); keep the transposed (in, out) layout for the kernel.
        self.w1_t = jax.random.uniform(k1, (input_dim, hidden_dim), jnp.float32, -lim1, lim1)
        self.b1 = jax.random.uniform(k2, (hidden_dim,), jnp.float32, -lim1, lim1)
        self.w2_t = jax.random.uniform(k3, (hidden_dim, output_dim), jnp.float32, -lim2, lim2)
        self.b2 = jax.random.uniform(k4, (output_dim,), jnp.float32, -lim2, lim2)

        # Per-generation tiling / VMEM budget.
        dflt = _tpu_defaults()
        tm_max = tm_max or dflt["tm_max"]
        tn_max = tn_max or dflt["tn_max"]
        th_max = th_max or dflt["th_max"]
        self.vmem_limit = int(vmem_limit or dflt["vmem_limit"])

        self.d_in_p = _round_up(input_dim, 128)
        h128 = _round_up(hidden_dim, 128)
        dout128 = _round_up(output_dim, 128)

        th = min(th_max, h128)
        tn = min(tn_max, dout128)
        tm = tm_max
        budget = int(0.85 * self.vmem_limit)   # headroom for compiler internal scratch
        while _vmem_bytes(tm, tn, th, self.d_in_p, 4) > budget:
            if th > 256:
                th //= 2
            elif tn > 256:
                tn //= 2
            elif tm > 128:
                tm //= 2
            else:
                break
        self.th, self.tn, self.tm_max_eff = th, tn, tm

        self.h_p = _round_up(h128, self.th)
        self.d_out_p = _round_up(dout128, self.tn)

        # Kernel-ready parameter copies: lane-dense (multiple-of-128) feature dims,
        # bf16 weights for the MXU, f32 biases for the f32 epilogue.
        self.w1_p = jnp.zeros((self.d_in_p, self.h_p), jnp.bfloat16).at[
            :input_dim, :hidden_dim].set(self.w1_t.astype(jnp.bfloat16))
        self.b1_p = jnp.zeros((1, self.h_p), jnp.float32).at[0, :hidden_dim].set(self.b1)
        self.w2_p = jnp.zeros((self.h_p, self.d_out_p), jnp.bfloat16).at[
            :hidden_dim, :output_dim].set(self.w2_t.astype(jnp.bfloat16))
        self.b2_p = jnp.zeros((1, self.d_out_p), jnp.float32).at[0, :output_dim].set(self.b2)

    def __call__(self, x):
        # x: (..., input_dim) -> (..., output_dim)
        lead = x.shape[:-1]
        x2d = x.reshape(-1, self.input_dim)
        M = x2d.shape[0]

        # Row tile: multiple of 16 (bf16 sublane packing), capped by the budgeted maximum.
        tm = min(self.tm_max_eff, _round_up(max(M, 1), 16))
        m_p = _round_up(M, tm)

        y2d = _ffn_forward(x2d, self.w1_p, self.b1_p, self.w2_p, self.b2_p,
                           tm=tm, tn=self.tn, th=self.th, m_p=m_p, d_in_p=self.d_in_p,
                           out_dim=self.output_dim, out_dtype=x.dtype,
                           vmem_limit=self.vmem_limit)
        return y2d.reshape(*lead, self.output_dim)


if __name__ == "__main__":
    key = jax.random.PRNGKey(0)
    k_x, k_p = jax.random.split(key)

    batch, seq = 2, 8
    input_dim, hidden_dim, output_dim = 32, 64, 32

    x = jax.random.normal(k_x, (batch, seq, input_dim), jnp.float32)

    model = FeedForwardPallas(input_dim, hidden_dim, output_dim, k_p)
    y = jax.block_until_ready(model(x))

    # Reference with matching precision: bf16 matmul operands, f32 accumulation/bias.
    xb = x.astype(jnp.bfloat16)
    h_ref = jnp.dot(xb, model.w1_t.astype(jnp.bfloat16),
                    preferred_element_type=jnp.float32) + model.b1
    h_ref = jnp.maximum(h_ref, 0.0)
    y_ref = jnp.dot(h_ref.astype(jnp.bfloat16), model.w2_t.astype(jnp.bfloat16),
                    preferred_element_type=jnp.float32) + model.b2

    assert y.shape == (batch, seq, output_dim)
    assert jnp.allclose(y, y_ref, atol=2e-2, rtol=2e-2), float(jnp.max(jnp.abs(y - y_ref)))

    print("KERNEL_OK")
</pallas_src>

<mosaic_0001>
module attributes {stable_mosaic.version = 11 : i64} {
  func.func @ffn_kernel(%arg0: i32, %arg1: i32, %arg2: i32, %arg3: memref<16x128xbf16, #tpu.memory_space<vmem>>, %arg4: memref<128x128xbf16, #tpu.memory_space<vmem>>, %arg5: memref<1x128xf32, #tpu.memory_space<vmem>>, %arg6: memref<128x128xbf16, #tpu.memory_space<vmem>>, %arg7: memref<1x128xf32, #tpu.memory_space<vmem>>, %arg8: memref<16x128xf32, #tpu.memory_space<vmem>>, %arg9: memref<16x128xf32, #tpu.memory_space<vmem>>) attributes {dimension_semantics = [#tpu.dimension_semantics<parallel>, #tpu.dimension_semantics<parallel>, #tpu.dimension_semantics<arbitrary>], iteration_bounds = array<i64: 1, 1, 1>, scalar_prefetch = 0 : i64, scratch_operands = 1 : i64, tpu.core_type = #tpu.core_type<tc>, window_params = [{transform_indices = @transform_0, window_bounds = array<i64: 16, 128>}, {transform_indices = @transform_1, window_bounds = array<i64: 128, 128>}, {transform_indices = @transform_2, window_bounds = array<i64: 1, 128>}, {transform_indices = @transform_3, window_bounds = array<i64: 128, 128>}, {transform_indices = @transform_4, window_bounds = array<i64: 1, 128>}, {transform_indices = @transform_5, window_bounds = array<i64: 16, 128>}]} {
    %c0_i32 = arith.constant 0 : i32
    %0 = arith.cmpi eq, %arg2, %c0_i32 : i32
    %1 = arith.extui %0 : i1 to i32
    %c0_i32_0 = arith.constant 0 : i32
    %2 = arith.cmpi ne, %1, %c0_i32_0 : i32
    scf.if %2 {
      %cst_16 = arith.constant 0.000000e+00 : f32
      %20 = vector.broadcast %cst_16 : f32 to vector<16x128xf32>
      %c0_17 = arith.constant 0 : index
      %c0_18 = arith.constant 0 : index
      %21 = vector.load %arg9[%c0_17, %c0_18] : memref<16x128xf32, #tpu.memory_space<vmem>>, vector<16x128xf32>
      tpu.vector_store %arg9[%c0_17, %c0_18], %20 {strides = array<i32>} : memref<16x128xf32, #tpu.memory_space<vmem>>, vector<16x128xf32>,
    } else {
    }
    %c0 = arith.constant 0 : index
    %c0_1 = arith.constant 0 : index
    %3 = vector.load %arg3[%c0, %c0_1] : memref<16x128xbf16, #tpu.memory_space<vmem>>, vector<16x128xbf16>
    %c0_2 = arith.constant 0 : index
    %c0_3 = arith.constant 0 : index
    %4 = vector.load %arg4[%c0_2, %c0_3] : memref<128x128xbf16, #tpu.memory_space<vmem>>, vector<128x128xbf16>
    %cst = arith.constant dense<0.000000e+00> : vector<16x128xf32>
    %5 = tpu.matmul %3, %4, %cst {dimension_numbers = #tpu.dot_dimension_numbers<[1], [0], [0], [1], [0, 0, 1, 1], [], []>} : vector<16x128xbf16>, vector<128x128xbf16>, vector<16x128xf32> -> vector<16x128xf32>
    %c0_4 = arith.constant 0 : index
    %c0_5 = arith.constant 0 : index
    %6 = vector.load %arg5[%c0_4, %c0_5] : memref<1x128xf32, #tpu.memory_space<vmem>>, vector<1x128xf32>
    %7 = vector.broadcast %6 : vector<1x128xf32> to vector<16x128xf32>
    %8 = arith.addf %5, %7 : vector<16x128xf32>
    %cst_6 = arith.constant 0.000000e+00 : f32
    %9 = vector.broadcast %cst_6 : f32 to vector<16x128xf32>
    %10 = arith.maximumf %8, %9 : vector<16x128xf32>
    %c0_7 = arith.constant 0 : index
    %c0_8 = arith.constant 0 : index
    %11 = vector.load %arg9[%c0_7, %c0_8] : memref<16x128xf32, #tpu.memory_space<vmem>>, vector<16x128xf32>
    %12 = arith.truncf %10 : vector<16x128xf32> to vector<16x128xbf16>
    %c0_9 = arith.constant 0 : index
    %c0_10 = arith.constant 0 : index
    %13 = vector.load %arg6[%c0_9, %c0_10] : memref<128x128xbf16, #tpu.memory_space<vmem>>, vector<128x128xbf16>
    %cst_11 = arith.constant dense<0.000000e+00> : vector<16x128xf32>
    %14 = tpu.matmul %12, %13, %cst_11 {dimension_numbers = #tpu.dot_dimension_numbers<[1], [0], [0], [1], [0, 0, 1, 1], [], []>} : vector<16x128xbf16>, vector<128x128xbf16>, vector<16x128xf32> -> vector<16x128xf32>
    %15 = arith.addf %11, %14 : vector<16x128xf32>
    %c0_12 = arith.constant 0 : index
    %c0_13 = arith.constant 0 : index
    %16 = vector.load %arg9[%c0_12, %c0_13] : memref<16x128xf32, #tpu.memory_space<vmem>>, vector<16x128xf32>
    tpu.vector_store %arg9[%c0_12, %c0_13], %15 {strides = array<i32>} : memref<16x128xf32, #tpu.memory_space<vmem>>, vector<16x128xf32>,
    %c0_i32_14 = arith.constant 0 : i32
    %17 = arith.cmpi eq, %arg2, %c0_i32_14 : i32
    %18 = arith.extui %17 : i1 to i32
    %c0_i32_15 = arith.constant 0 : i32
    %19 = arith.cmpi ne, %18, %c0_i32_15 : i32
    scf.if %19 {
      %c0_16 = arith.constant 0 : index
      %c0_17 = arith.constant 0 : index
      %20 = vector.load %arg9[%c0_16, %c0_17] : memref<16x128xf32, #tpu.memory_space<vmem>>, vector<16x128xf32>
      %c0_18 = arith.constant 0 : index
      %c0_19 = arith.constant 0 : index
      %21 = vector.load %arg7[%c0_18, %c0_19] : memref<1x128xf32, #tpu.memory_space<vmem>>, vector<1x128xf32>
      %22 = vector.broadcast %21 : vector<1x128xf32> to vector<16x128xf32>
      %23 = arith.addf %20, %22 : vector<16x128xf32>
      %c0_20 = arith.constant 0 : index
      %c0_21 = arith.constant 0 : index
      %24 = vector.load %arg8[%c0_20, %c0_21] : memref<16x128xf32, #tpu.memory_space<vmem>>, vector<16x128xf32>
      tpu.vector_store %arg8[%c0_20, %c0_21], %23 {strides = array<i32>} : memref<16x128xf32, #tpu.memory_space<vmem>>, vector<16x128xf32>,
    } else {
    }
    return
  }
  func.func @transform_0(%arg0: i32, %arg1: i32, %arg2: i32) -> (i32, i32) {
    %c0_i32 = arith.constant 0 : i32
    %c0_i32_0 = arith.constant 0 : i32
    return %arg0, %c0_i32 : i32, i32
  }
  func.func @transform_1(%arg0: i32, %arg1: i32, %arg2: i32) -> (i32, i32) {
    %c0_i32 = arith.constant 0 : i32
    %c0_i32_0 = arith.constant 0 : i32
    return %c0_i32, %arg2 : i32, i32
  }
  func.func @transform_2(%arg0: i32, %arg1: i32, %arg2: i32) -> (i32, i32) {
    %c0_i32 = arith.constant 0 : i32
    %c0_i32_0 = arith.constant 0 : i32
    return %c0_i32, %arg2 : i32, i32
  }
  func.func @transform_3(%arg0: i32, %arg1: i32, %arg2: i32) -> (i32, i32) {
    %c0_i32 = arith.constant 0 : i32
    return %arg2, %arg1 : i32, i32
  }
  func.func @transform_4(%arg0: i32, %arg1: i32, %arg2: i32) -> (i32, i32) {
    %c0_i32 = arith.constant 0 : i32
    %c0_i32_0 = arith.constant 0 : i32
    return %c0_i32, %arg1 : i32, i32
  }
  func.func @transform_5(%arg0: i32, %arg1: i32, %arg2: i32) -> (i32, i32) {
    %c0_i32 = arith.constant 0 : i32
    return %arg0, %arg1 : i32, i32
  }
}

</mosaic_0001>

<llo_original>
// kernel: _ffn_forward.1
$region0: #{_ffn_forward.1}
  #allocation0 [shape = 'u32[]', space=smem, size = 0x4, offset = 0x4, fixed_abs, tag = 'smem constant byte address 0x4 - core index']
  #allocation1 [shape = 'u32[144,128]{1,0:T(1,128)}', space=vmem, size = 0x12000, scoped, tag = 'internal scratch']
  #allocation2 [shape = 'f32[16,128]{1,0:T(8,128)}', space=vmem, size = 0x2000, scoped, tag = 'scratch operand']
  %s0 = inlined_call_operand.hbm [shape: bf16[16,128], index: 0, kind: input, shape index: {}]
  %s1 = inlined_call_operand.hbm [shape: bf16[128,128], index: 1, kind: input, shape index: {}]
  %s2 = inlined_call_operand.hbm [shape: f32[1,128], index: 2, kind: input, shape index: {}]
  %s3 = inlined_call_operand.hbm [shape: bf16[128,128], index: 3, kind: input, shape index: {}]
  %s4 = inlined_call_operand.hbm [shape: f32[1,128], index: 4, kind: input, shape index: {}]
  %s5 = inlined_call_operand.hbm [shape: f32[16,128], index: 5, kind: output, shape index: {}]
  %s6 = sld [smem:[#allocation0]]
  $region58: #{_ffn_forward.1} parent=0
    _
  %s8 = ssub.s32 1, %s6
  %s9 = scalar_select 0, %s8, %s6
  $region1: #{_ffn_forward.1} parent=0
    #allocation3 [shape = 'u8[4096]{0}', space=vmem, size = 0x1000, scoped, tag = 'input window, operand 0, single buffered']
    #allocation4 [shape = 's32[1]{0}', space=sflag, size = 0x4, scoped, tag = 'scoped memory for _ffn_forward.1']
    #allocation5 [shape = 's32[1]{0}', space=sflag, size = 0x4, scoped, tag = 'scoped memory for _ffn_forward.1']
    #allocation6 [shape = 'u8[32768]{0}', space=vmem, size = 0x8000, scoped, tag = 'input window, operand 1, single buffered']
    #allocation7 [shape = 's32[1]{0}', space=sflag, size = 0x4, scoped, tag = 'scoped memory for _ffn_forward.1']
    #allocation8 [shape = 'u8[512]{0}', space=vmem, size = 0x400, scoped, tag = 'input window, operand 2, single buffered']
    #allocation9 [shape = 'u8[32768]{0}', space=vmem, size = 0x8000, scoped, tag = 'input window, operand 3, single buffered']
    #allocation10 [shape = 's32[1]{0}', space=sflag, size = 0x4, scoped, tag = 'scoped memory for _ffn_forward.1']
    #allocation11 [shape = 'u8[512]{0}', space=vmem, size = 0x400, scoped, tag = 'input window, operand 4, single buffered']
    #allocation12 [shape = 'u8[8192]{0}', space=vmem, size = 0x2000, scoped, tag = 'output window, operand 0, single buffered']
    %10 = vsyncpa [#allocation4], 0
    %11 = vsyncpa [#allocation7], 0
    %12 = vsyncpa [#allocation10], 0
    %13 = vsyncpa [#allocation5], 0
    // Predicated region
    $region2: #{_ffn_forward.1} parent=1 // pred_check
      _
    $region3: #{_ffn_forward.1} parent=1 // pred_check_branch
      %15 = sbr.rel (0) target = $region5
    $region4: #{_ffn_forward.1} parent=1 // pred_region
      %s17 = ssub.s32 128, 128
      %18 = vsyncadd [#allocation4], %s17
      %s19 = sshll.u32 [#allocation3], 4
      %s20 = int_to_ptr.vmem [resolvable:$true] %s19
      %25 = dma.hbm_to_vmem [thread:$0]  %s0, 128, %s20, [#allocation4], 64, 64, 4
    $region5: #{_ffn_forward.1} parent=1 // pred_fallthru
      _
    // Predicated region
    $region6: #{_ffn_forward.1} parent=1 // pred_check
      _
    $region7: #{_ffn_forward.1} parent=1 // pred_check_branch
      %27 = sbr.rel (0) target = $region9
    $region8: #{_ffn_forward.1} parent=1 // pred_region
      %s29 = ssub.s32 1024, 1024
      %30 = vsyncadd [#allocation7], %s29
      %s31 = sshll.u32 [#allocation6], 4
      %s32 = int_to_ptr.vmem [resolvable:$true] %s31
      %37 = dma.hbm_to_vmem [thread:$0]  %s1, 1024, %s32, [#allocation7], 64, 64, 4
    $region9: #{_ffn_forward.1} parent=1 // pred_fallthru
      _
    // Predicated region
    $region10: #{_ffn_forward.1} parent=1 // pred_check
      _
    $region11: #{_ffn_forward.1} parent=1 // pred_check_branch
      %39 = sbr.rel (0) target = $region13
    $region12: #{_ffn_forward.1} parent=1 // pred_region
      %s41 = ssub.s32 16, 16
      %42 = vsyncadd [#allocation7], %s41
      %s44 = sshll.u32 [#allocation8], 4
      %s45 = int_to_ptr.vmem [resolvable:$true] %s44
      %47 = dma.hbm_to_vmem [thread:$0]  %s2, 16, %s45, [#allocation7]
    $region13: #{_ffn_forward.1} parent=1 // pred_fallthru
      _
    // Predicated region
    $region14: #{_ffn_forward.1} parent=1 // pred_check
      _
    $region15: #{_ffn_forward.1} parent=1 // pred_check_branch
      %49 = sbr.rel (0) target = $region17
    $region16: #{_ffn_forward.1} parent=1 // pred_region
      %s51 = ssub.s32 1024, 1024
      %52 = vsyncadd [#allocation10], %s51
      %s53 = sshll.u32 [#allocation9], 4
      %s54 = int_to_ptr.vmem [resolvable:$true] %s53
      %59 = dma.hbm_to_vmem [thread:$0]  %s3, 1024, %s54, [#allocation10], 64, 64, 4
    $region17: #{_ffn_forward.1} parent=1 // pred_fallthru
      _
    // Predicated region
    $region18: #{_ffn_forward.1} parent=1 // pred_check
      _
    $region19: #{_ffn_forward.1} parent=1 // pred_check_branch
      %61 = sbr.rel (0) target = $region21
    $region20: #{_ffn_forward.1} parent=1 // pred_region
      %s63 = ssub.s32 16, 16
      %64 = vsyncadd [#allocation10], %s63
      %s66 = sshll.u32 [#allocation11], 4
      %s67 = int_to_ptr.vmem [resolvable:$true] %s66
      %69 = dma.hbm_to_vmem [thread:$0]  %s4, 16, %s67, [#allocation10]
    $region21: #{_ffn_forward.1} parent=1 // pred_fallthru
      _
    // Predicated region
    $region22: #{_ffn_forward.1} parent=1 // pred_check
      _
    $region23: #{_ffn_forward.1} parent=1 // pred_check_branch
      %71 = sbr.rel (0) target = $region25
    $region24: #{_ffn_forward.1} parent=1 // pred_region
      %72 = dma.done [#allocation4], 128
    $region25: #{_ffn_forward.1} parent=1 // pred_fallthru
      _
    // Predicated region
    $region26: #{_ffn_forward.1} parent=1 // pred_check
      _
    $region27: #{_ffn_forward.1} parent=1 // pred_check_branch
      %74 = sbr.rel (0) target = $region29
    $region28: #{_ffn_forward.1} parent=1 // pred_region
      %75 = dma.done [#allocation7], 1024
    $region29: #{_ffn_forward.1} parent=1 // pred_fallthru
      _
    // Predicated region
    $region30: #{_ffn_forward.1} parent=1 // pred_check
      _
    $region31: #{_ffn_forward.1} parent=1 // pred_check_branch
      %77 = sbr.rel (0) target = $region33
    $region32: #{_ffn_forward.1} parent=1 // pred_region
      %78 = dma.done [#allocation7], 16
    $region33: #{_ffn_forward.1} parent=1 // pred_fallthru
      _
    // Predicated region
    $region34: #{_ffn_forward.1} parent=1 // pred_check
      _
    $region35: #{_ffn_forward.1} parent=1 // pred_check_branch
      %80 = sbr.rel (0) target = $region37
    $region36: #{_ffn_forward.1} parent=1 // pred_region
      %81 = dma.done [#allocation10], 1024
    $region37: #{_ffn_forward.1} parent=1 // pred_fallthru
      _
    // Predicated region
    $region38: #{_ffn_forward.1} parent=1 // pred_check
      _
    $region39: #{_ffn_forward.1} parent=1 // pred_check_branch
      %83 = sbr.rel (0) target = $region41
    $region40: #{_ffn_forward.1} parent=1 // pred_region
      %84 = dma.done [#allocation10], 16
    $region41: #{_ffn_forward.1} parent=1 // pred_fallthru
      _
    %p86 = scmp.eq.s32.totalorder 0, 0
    // Predicated region
    $region42: #{_ffn_forward.1} parent=1 // pred_check
      %p87 = pneg %p86
    $region43: #{_ffn_forward.1} parent=1 // pred_check_branch
      %89 = sbr.rel (%p87) target = $region45
    $region44: #{_ffn_forward.1} parent=1 // pred_region
      %90 = vst [vmem:[#allocation2] sm:$0xff] 0.0
      %91 = vst [vmem:[#allocation2 + $0x8] sm:$0xff] 0.0
    $region45: #{_ffn_forward.1} parent=1 // pred_fallthru
      _
    %v92 = vld [vmem:[#allocation3] sm:$0xf]
    %v93 = vld [vmem:[#allocation3 + $0x4] sm:$0xf]
    %v94 = vld [vmem:[#allocation6] sm:$0xf]
    %v95 = vld [vmem:[#allocation6 + $0x4] sm:$0xf]
    %v96 = vld [vmem:[#allocation6 + $0x8] sm:$0xf]
    %v97 = vld [vmem:[#allocation6 + $0xc] sm:$0xf]
    %v98 = vld [vmem:[#allocation6 + $0x10] sm:$0xf]
    %v99 = vld [vmem:[#allocation6 + $0x14] sm:$0xf]
    %v100 = vld [vmem:[#allocation6 + $0x18] sm:$0xf]
    %v101 = vld [vmem:[#allocation6 + $0x1c] sm:$0xf]
    %v102 = vld [vmem:[#allocation6 + $0x20] sm:$0xf]
    %v103 = vld [vmem:[#allocation6 + $0x24] sm:$0xf]
    %v104 = vld [vmem:[#allocation6 + $0x28] sm:$0xf]
    %v105 = vld [vmem:[#allocation6 + $0x2c] sm:$0xf]
    %v106 = vld [vmem:[#allocation6 + $0x30] sm:$0xf]
    %v107 = vld [vmem:[#allocation6 + $0x34] sm:$0xf]
    %v108 = vld [vmem:[#allocation6 + $0x38] sm:$0xf]
    %v109 = vld [vmem:[#allocation6 + $0x3c] sm:$0xf]
    %v110 = vld [vmem:[#allocation8] sm:$0x1]
    %v112 = vlaneseq
    %v113 = vshrl.u32 %v112, 7
    %v114 = vsub.s32 0, %v113
    %v115 = vrot.slane %v110, %v114
    %v119 = vunpack.c.l.b16 %v92
    %v120 = vunpack.c.l.b16 %v93
    %v121 = vpack.c.b16 %v120, %v119
    %v139 = vunpack.c.l.b16 %v94
    %v140 = vunpack.c.l.b16 %v95
    %v141 = vunpack.c.l.b16 %v96
    %v142 = vunpack.c.l.b16 %v97
    %v143 = vunpack.c.l.b16 %v98
    %v144 = vunpack.c.l.b16 %v99
    %v145 = vunpack.c.l.b16 %v100
    %v146 = vunpack.c.l.b16 %v101
    %v147 = vunpack.c.l.b16 %v102
    %v148 = vunpack.c.l.b16 %v103
    %v149 = vunpack.c.l.b16 %v104
    %v150 = vunpack.c.l.b16 %v105
    %v151 = vunpack.c.l.b16 %v106
    %v152 = vunpack.c.l.b16 %v107
    %v153 = vunpack.c.l.b16 %v108
    %v154 = vunpack.c.l.b16 %v109
    %v155 = vpack.c.b16 %v140, %v139
    %v156 = vpack.c.b16 %v142, %v141
    %v157 = vpack.c.b16 %v144, %v143
    %v158 = vpack.c.b16 %v146, %v145
    %v159 = vpack.c.b16 %v148, %v147
    %v160 = vpack.c.b16 %v150, %v149
    %v161 = vpack.c.b16 %v152, %v151
    %v162 = vpack.c.b16 %v154, %v153
    %171 = vmatprep.subr.bf16.mxu0 0
    %172 = vmatpush1.bf16.msra.mxu0 %v155
    %173 = vmatprep.subr.bf16.mxu0 0
    %174 = vmatpush1.bf16.msra.mxu0 %v156
    %175 = vmatprep.subr.bf16.mxu0 0
    %176 = vmatpush1.bf16.msra.mxu0 %v157
    %177 = vmatprep.subr.bf16.mxu0 0
    %178 = vmatpush1.bf16.msra.mxu0 %v158
    %179 = vmatprep.subr.bf16.mxu0 0
    %180 = vmatpush1.bf16.msra.mxu0 %v159
    %181 = vmatprep.subr.bf16.mxu0 0
    %182 = vmatpush1.bf16.msra.mxu0 %v160
    %183 = vmatprep.subr.bf16.mxu0 0
    %184 = vmatpush1.bf16.msra.mxu0 %v161
    %185 = vmatprep.subr.bf16.mxu0 0
    %186 = vmatpush1.bf16.msra.mxu0 %v162
    %187 = vmatprep.subr.bf16.mxu0 0
    %188 = vmatpush1.bf16.msra.mxu0 0
    %189 = vmatprep.subr.bf16.mxu0 0
    %190 = vmatpush1.bf16.msra.mxu0 0
    %191 = vmatprep.subr.bf16.mxu0 0
    %192 = vmatpush1.bf16.msra.mxu0 0
    %193 = vmatprep.subr.bf16.mxu0 0
    %194 = vmatpush1.bf16.msra.mxu0 0
    %195 = vmatprep.subr.bf16.mxu0 0
    %196 = vmatpush1.bf16.msra.mxu0 0
    %197 = vmatprep.subr.bf16.mxu0 0
    %198 = vmatpush1.bf16.msra.mxu0 0
    %199 = vmatprep.subr.bf16.mxu0 0
    %200 = vmatpush1.bf16.msra.mxu0 0
    %201 = vmatprep.subr.bf16.mxu0 0
    %202 = vmatpush1.bf16.msra.mxu0 0
    %203 = vmatprep.mubr.bf16.mxu0 0
    %204 = vmatmul.mubr.bf16.gmra.mrb[0].mxu0 %v121
    %v205 = vpop.f32.mrb[0].mxu0
    %v206 = vadd.f32 %v115, %v205
    %v207 = vpop.f32.mrb[0].mxu0
    %v208 = vpop.f32.mrb[0].mxu0
    %v209 = vadd.f32 %v115, %v208
    %v210 = vpop.f32.mrb[0].mxu0
    %211 = vdwg.mxu0
    %v212 = vmax.f32 %v206, 0.0
    %v213 = vmax.f32 %v209, 0.0
    %v214 = vld [vmem:[#allocation2] sm:$0xff]
    %v215 = vld [vmem:[#allocation2 + $0x8] sm:$0xff]
    %v216 = vpack.c.bf16 %v213, %v212
    %v217 = vld [vmem:[#allocation9] sm:$0xf]
    %v218 = vld [vmem:[#allocation9 + $0x4] sm:$0xf]
    %v219 = vld [vmem:[#allocation9 + $0x8] sm:$0xf]
    %v220 = vld [vmem:[#allocation9 + $0xc] sm:$0xf]
    %v221 = vld [vmem:[#allocation9 + $0x10] sm:$0xf]
    %v222 = vld [vmem:[#allocation9 + $0x14] sm:$0xf]
    %v223 = vld [vmem:[#allocation9 + $0x18] sm:$0xf]
    %v224 = vld [vmem:[#allocation9 + $0x1c] sm:$0xf]
    %v225 = vld [vmem:[#allocation9 + $0x20] sm:$0xf]
    %v226 = vld [vmem:[#allocation9 + $0x24] sm:$0xf]
    %v227 = vld [vmem:[#allocation9 + $0x28] sm:$0xf]
    %v228 = vld [vmem:[#allocation9 + $0x2c] sm:$0xf]
    %v229 = vld [vmem:[#allocation9 + $0x30] sm:$0xf]
    %v230 = vld [vmem:[#allocation9 + $0x34] sm:$0xf]
    %v231 = vld [vmem:[#allocation9 + $0x38] sm:$0xf]
    %v232 = vld [vmem:[#allocation9 + $0x3c] sm:$0xf]
    %v249 = vunpack.c.l.b16 %v217
    %v250 = vunpack.c.l.b16 %v218
    %v251 = vunpack.c.l.b16 %v219
    %v252 = vunpack.c.l.b16 %v220
    %v253 = vunpack.c.l.b16 %v221
    %v254 = vunpack.c.l.b16 %v222
    %v255 = vunpack.c.l.b16 %v223
    %v256 = vunpack.c.l.b16 %v224
    %v257 = vunpack.c.l.b16 %v225
    %v258 = vunpack.c.l.b16 %v226
    %v259 = vunpack.c.l.b16 %v227
    %v260 = vunpack.c.l.b16 %v228
    %v261 = vunpack.c.l.b16 %v229
    %v262 = vunpack.c.l.b16 %v230
    %v263 = vunpack.c.l.b16 %v231
    %v264 = vunpack.c.l.b16 %v232
    %v265 = vpack.c.b16 %v250, %v249
    %v266 = vpack.c.b16 %v252, %v251
    %v267 = vpack.c.b16 %v254, %v253
    %v268 = vpack.c.b16 %v256, %v255
    %v269 = vpack.c.b16 %v258, %v257
    %v270 = vpack.c.b16 %v260, %v259
    %v271 = vpack.c.b16 %v262, %v261
    %v272 = vpack.c.b16 %v264, %v263
    %281 = vmatprep.subr.bf16.mxu0 0
    %282 = vmatpush1.bf16.msra.mxu0 %v265
    %283 = vmatprep.subr.bf16.mxu0 0
    %284 = vmatpush1.bf16.msra.mxu0 %v266
    %285 = vmatprep.subr.bf16.mxu0 0
    %286 = vmatpush1.bf16.msra.mxu0 %v267
    %287 = vmatprep.subr.bf16.mxu0 0
    %288 = vmatpush1.bf16.msra.mxu0 %v268
    %289 = vmatprep.subr.bf16.mxu0 0
    %290 = vmatpush1.bf16.msra.mxu0 %v269
    %291 = vmatprep.subr.bf16.mxu0 0
    %292 = vmatpush1.bf16.msra.mxu0 %v270
    %293 = vmatprep.subr.bf16.mxu0 0
    %294 = vmatpush1.bf16.msra.mxu0 %v271
    %295 = vmatprep.subr.bf16.mxu0 0
    %296 = vmatpush1.bf16.msra.mxu0 %v272
    %297 = vmatprep.subr.bf16.mxu0 0
    %298 = vmatpush1.bf16.msra.mxu0 0
    %299 = vmatprep.subr.bf16.mxu0 0
    %300 = vmatpush1.bf16.msra.mxu0 0
    %301 = vmatprep.subr.bf16.mxu0 0
    %302 = vmatpush1.bf16.msra.mxu0 0
    %303 = vmatprep.subr.bf16.mxu0 0
    %304 = vmatpush1.bf16.msra.mxu0 0
    %305 = vmatprep.subr.bf16.mxu0 0
    %306 = vmatpush1.bf16.msra.mxu0 0
    %307 = vmatprep.subr.bf16.mxu0 0
    %308 = vmatpush1.bf16.msra.mxu0 0
    %309 = vmatprep.subr.bf16.mxu0 0
    %310 = vmatpush1.bf16.msra.mxu0 0
    %311 = vmatprep.subr.bf16.mxu0 0
    %312 = vmatpush1.bf16.msra.mxu0 0
    %313 = vmatprep.mubr.bf16.mxu0 0
    %314 = vmatmul.mubr.bf16.gmra.mrb[0].mxu0 %v216
    %v315 = vpop.f32.mrb[0].mxu0
    %v316 = vadd.f32 0.0, %v315
    %v317 = vpop.f32.mrb[0].mxu0
    %v318 = vpop.f32.mrb[0].mxu0
    %v319 = vadd.f32 0.0, %v318
    %v320 = vpop.f32.mrb[0].mxu0
    %321 = vdwg.mxu0
    %v322 = vadd.f32 %v214, %v316
    %v323 = vadd.f32 %v215, %v319
    %324 = vst [vmem:[#allocation2] sm:$0xff] %v322
    %325 = vst [vmem:[#allocation2 + $0x8] sm:$0xff] %v323
    // Predicated region
    $region46: #{_ffn_forward.1} parent=1 // pred_check
      %p326 = pneg %p86
    $region47: #{_ffn_forward.1} parent=1 // pred_check_branch
      %328 = sbr.rel (%p326) target = $region49
    $region48: #{_ffn_forward.1} parent=1 // pred_region
      %v329 = vld [vmem:[#allocation2] sm:$0xff]
      %v330 = vld [vmem:[#allocation2 + $0x8] sm:$0xff]
      %v331 = vld [vmem:[#allocation11] sm:$0x1]
      %v333 = vlaneseq
      %v334 = vshrl.u32 %v333, 7
      %v335 = vsub.s32 0, %v334
      %v336 = vrot.slane %v331, %v335
      %v338 = vadd.f32 %v329, %v336
      %v339 = vadd.f32 %v330, %v336
      %340 = vst [vmem:[#allocation12] sm:$0xff] %v338
      %341 = vst [vmem:[#allocation12 + $0x8] sm:$0xff] %v339
    $region49: #{_ffn_forward.1} parent=1 // pred_fallthru
      _
    // Predicated region
    $region50: #{_ffn_forward.1} parent=1 // pred_check
      _
    $region51: #{_ffn_forward.1} parent=1 // pred_check_branch
      %343 = sbr.rel (0) target = $region53
    $region52: #{_ffn_forward.1} parent=1 // pred_region
      %s345 = ssub.s32 256, 256
      %346 = vsyncadd [#allocation5], %s345
      %s347 = sshll.u32 [#allocation12], 4
      %s348 = int_to_ptr.vmem [resolvable:$true] %s347
      %353 = dma.vmem_to_hbm [thread:$0]  %s348, 256, %s5, [#allocation5], 128, 128, 8
    $region53: #{_ffn_forward.1} parent=1 // pred_fallthru
      _
    // Predicated region
    $region54: #{_ffn_forward.1} parent=1 // pred_check
      _
    $region55: #{_ffn_forward.1} parent=1 // pred_check_branch
      %355 = sbr.rel (0) target = $region57
    $region56: #{_ffn_forward.1} parent=1 // pred_region
      %356 = dma.done [#allocation5], 256
    $region57: #{_ffn_forward.1} parent=1 // pred_fallthru
      _
    %357 = vsyncpa [#allocation4], 1
    %358 = vsyncpa [#allocation7], 1
    %359 = vsyncpa [#allocation10], 1
    %360 = vsyncpa [#allocation5], 1

</llo_original>
